<compile_context>
chip_gen: v7x
topology: tpu7x:2x2x1
jax: 0.10.0
libtpu: 0.0.40
codegen_flags: <defaults>
</compile_context>

<pallas_src>
import jax
import jax.numpy as jnp
from jax.experimental import pallas as pl
from jax.experimental.pallas import tpu as pltpu


# ---------------------------------------------------------------------------
# Kernel 1: meta-net MLP (Linear -> ReLU -> Linear).  Tiny; one grid step.
# ---------------------------------------------------------------------------
def meta_net_kernel(imf_ref, w1_ref, b1_ref, w2_ref, b2_ref, bias_ref):
    x = imf_ref[...].astype(jnp.float32)                                  # (B, vis_dim)
    h = jnp.dot(x, w1_ref[...].astype(jnp.float32),
                preferred_element_type=jnp.float32)                       # (B, hid)
    h = jnp.maximum(h + b1_ref[...].astype(jnp.float32), 0.0)             # ReLU
    bias = jnp.dot(h, w2_ref[...].astype(jnp.float32),
                   preferred_element_type=jnp.float32)                    # (B, ctx_dim)
    bias_ref[...] = bias + b2_ref[...].astype(jnp.float32)


def meta_net_bias(im_features, w1, b1, w2, b2):
    B = im_features.shape[0]
    ctx_dim = w2.shape[1]
    return pl.pallas_call(
        meta_net_kernel,
        out_shape=jax.ShapeDtypeStruct((B, ctx_dim), jnp.float32),
    )(im_features, w1, b1, w2, b2)


# ---------------------------------------------------------------------------
# Kernel 2: prompt assembly (lane-folded output).
# ---------------------------------------------------------------------------
def prompts_kernel(ctxf_ref, bias_ref, prefix_ref, suffix_ref, out_ref):
    # ctxf_ref  : (1, n_ctx*ctx_dim)     lane-flattened learnable ctx (resident)
    # bias_ref  : (Bt, ctx_dim) f32      meta-net bias, batch tile
    # prefix_ref: (Tc, ctx_dim)          SOS embeddings, class tile (resident on inner axis)
    # suffix_ref: (Tc, n_suf*ctx_dim)    lane-flattened class/EOS embeddings, class tile
    # out_ref   : (Bt, Tc, L*ctx_dim)    lane-folded prompts tile
    Bt = out_ref.shape[0]
    Tc, ctx_dim = prefix_ref.shape
    nc_cd = ctxf_ref.shape[1]                   # n_ctx * ctx_dim
    n_ctx = nc_cd // ctx_dim
    ctx_end = (1 + n_ctx) * ctx_dim

    # ctx_shifted in lane-folded form: (Bt, n_ctx*ctx_dim).  Broadcasting the
    # bias over the n_ctx token slots is a lane-aligned replication (concat of
    # 128-lane pieces), so no sublane->lane retiling is needed.
    bias_rep = jnp.concatenate([bias_ref[...]] * n_ctx, axis=1)           # (Bt, n_ctx*ctx_dim)
    ctx_flat = (ctxf_ref[...].astype(jnp.float32) + bias_rep).astype(out_ref.dtype)

    # Batch-invariant pieces: load + cast once per grid step (hoisted out of b).
    pre = prefix_ref[...].astype(out_ref.dtype)                           # (Tc, ctx_dim)
    suf = suffix_ref[...].astype(out_ref.dtype)                           # (Tc, n_suf*ctx_dim)

    # Per batch element: three lane-aligned region stores (all offsets/widths
    # are multiples of 128 lanes -> wide unmasked vst), no concat slabs, no
    # per-b prefix/suffix rematerialization.  Bt is small and static.
    for b in range(Bt):
        out_ref[b, :, :ctx_dim] = pre
        out_ref[b, :, ctx_dim:ctx_end] = jnp.broadcast_to(
            ctx_flat[b][None, :], (Tc, nc_cd))
        out_ref[b, :, ctx_end:] = suf


def _pick_tile(n, cap):
    """Largest divisor of n that is <= cap and sublane-friendly (multiple of 8),
    falling back to the full extent (always a legal block shape)."""
    for t in range(min(n, cap), 0, -1):
        if n % t == 0 and (t % 8 == 0 or t == n):
            return t
    return n


def prompt_learner_forward(im_features, w1, b1, w2, b2, ctx, prefix, suffix,
                           *, batch_tile=8, class_tile=8):
    """prefix: (n_cls, 1, ctx_dim), suffix: (n_cls, n_suf, ctx_dim) as in the module."""
    B, _ = im_features.shape
    n_ctx, ctx_dim = ctx.shape
    n_cls = prefix.shape[0]
    n_suf = suffix.shape[1]
    L = 1 + n_ctx + n_suf

    Bt = _pick_tile(B, batch_tile)
    Tc = _pick_tile(n_cls, class_tile)

    # Stage 1: meta-net bias (tiny MLP kept out of the assembly kernel).
    bias = meta_net_bias(im_features, w1, b1, w2, b2)                     # (B, ctx_dim) f32

    # Lane-dense host-side layouts (contiguous reshapes: free).
    prefix2d = prefix.reshape(n_cls, ctx_dim)
    suffix2d = suffix.reshape(n_cls, n_suf * ctx_dim)
    ctx_flat = ctx.reshape(1, n_ctx * ctx_dim)

    # Class outer, batch inner: prefix/suffix (and ctx) blocks stay resident
    # across the inner axis, so the class-embedding table is read from HBM once.
    grid = (n_cls // Tc, B // Bt)

    out = pl.pallas_call(
        prompts_kernel,
        out_shape=jax.ShapeDtypeStruct((B, n_cls, L * ctx_dim), im_features.dtype),
        grid_spec=pltpu.PrefetchScalarGridSpec(
            num_scalar_prefetch=0,
            grid=grid,
            in_specs=[
                pl.BlockSpec((1, n_ctx * ctx_dim), lambda c, b: (0, 0)),          # ctx (flat)
                pl.BlockSpec((Bt, ctx_dim), lambda c, b: (b, 0)),                 # bias
                pl.BlockSpec((Tc, ctx_dim), lambda c, b: (c, 0)),                 # token_prefix
                pl.BlockSpec((Tc, n_suf * ctx_dim), lambda c, b: (c, 0)),         # token_suffix
            ],
            out_specs=pl.BlockSpec((Bt, Tc, L * ctx_dim), lambda c, b: (b, c, 0)),
        ),
        compiler_params=pltpu.CompilerParams(
            # No cross-step state: both axes independent -> both parallel
            # (megacore sharding on v7x; no-op on v5e/v6e).
            dimension_semantics=("parallel", "parallel"),
            # 48 MiB is safe on v7x (64 MiB/TC); v5e/v6e can go to 64-96 MiB
            # with larger Tc/Bt if desired.
            vmem_limit_bytes=48 * 1024 * 1024),
    )(ctx_flat, bias, prefix2d, suffix2d)

    # Free contiguous reshape back to the module's (B, n_cls, L, ctx_dim) view.
    return out.reshape(B, n_cls, L, ctx_dim)


def prompt_learner_reference(im_features, w1, b1, w2, b2, ctx, prefix, suffix):
    """Pure-JAX reference mirroring the PyTorch forward."""
    h = jnp.maximum(im_features @ w1 + b1[0], 0.0)
    bias = h @ w2 + b2[0]                                  # (B, ctx_dim)
    ctx_shifted = ctx[None, :, :] + bias[:, None, :]       # (B, n_ctx, ctx_dim)
    B = im_features.shape[0]
    n_cls = prefix.shape[0]
    pre = jnp.broadcast_to(prefix[None], (B,) + prefix.shape)
    suf = jnp.broadcast_to(suffix[None], (B,) + suffix.shape)
    ctx_b = jnp.broadcast_to(ctx_shifted[:, None], (B, n_cls) + ctx_shifted.shape[1:])
    return jnp.concatenate([pre, ctx_b, suf], axis=2)


if __name__ == "__main__":
    # Small, CLIP-like (scaled-down) configuration.
    B = 16           # batch of image features (2 batch tiles of 8)
    vis_dim = 128    # visual.output_dim
    hid = vis_dim // 16          # meta_net hidden = 8
    ctx_dim = 128    # ln_final width
    n_ctx = 4        # number of context tokens
    n_cls = 16       # number of classnames (2 class tiles of 8)
    n_suf = 3        # suffix tokens (class name + '.' + padding)
    dtype = jnp.float32

    key = jax.random.PRNGKey(0)
    k_imf, k_w1, k_b1, k_w2, k_b2, k_ctx, k_pre, k_suf = jax.random.split(key, 8)

    im_features = jax.random.normal(k_imf, (B, vis_dim), dtype)

    # meta_net parameters (deterministic synthetic init; PyTorch default-like scale)
    w1 = jax.random.normal(k_w1, (vis_dim, hid), dtype) * (1.0 / jnp.sqrt(vis_dim))
    b1 = jax.random.normal(k_b1, (1, hid), dtype) * 0.01
    w2 = jax.random.normal(k_w2, (hid, ctx_dim), dtype) * (1.0 / jnp.sqrt(hid))
    b2 = jax.random.normal(k_b2, (1, ctx_dim), dtype) * 0.01

    # Learnable context vectors: nn.init.normal_(std=0.02)
    ctx = jax.random.normal(k_ctx, (n_ctx, ctx_dim), dtype) * 0.02

    # Frozen token-embedding buffers (synthetic stand-ins for CLIP embeddings)
    token_prefix = jax.random.normal(k_pre, (n_cls, 1, ctx_dim), dtype) * 0.02
    token_suffix = jax.random.normal(k_suf, (n_cls, n_suf, ctx_dim), dtype) * 0.02

    prompts = prompt_learner_forward(im_features, w1, b1, w2, b2,
                                     ctx, token_prefix, token_suffix,
                                     batch_tile=8, class_tile=8)
    prompts = jax.block_until_ready(prompts)

    ref = prompt_learner_reference(im_features, w1, b1, w2, b2,
                                   ctx, token_prefix, token_suffix)

    assert prompts.shape == (B, n_cls, 1 + n_ctx + n_suf, ctx_dim), prompts.shape
    assert jnp.allclose(prompts, ref, atol=1e-5, rtol=1e-5), "mismatch vs reference"

    print("KERNEL_OK")
</pallas_src>

<mosaic_0001>
module attributes {stable_mosaic.version = 11 : i64} {
  func.func @meta_net_kernel(%arg0: memref<16x128xf32, #tpu.memory_space<vmem>>, %arg1: memref<128x8xf32, #tpu.memory_space<vmem>>, %arg2: memref<1x8xf32, #tpu.memory_space<vmem>>, %arg3: memref<8x128xf32, #tpu.memory_space<vmem>>, %arg4: memref<1x128xf32, #tpu.memory_space<vmem>>, %arg5: memref<16x128xf32, #tpu.memory_space<vmem>>) attributes {dimension_semantics = [], scalar_prefetch = 0 : i64, scratch_operands = 0 : i64, tpu.core_type = #tpu.core_type<tc>} {
    %c0 = arith.constant 0 : index
    %c0_0 = arith.constant 0 : index
    %0 = vector.load %arg0[%c0, %c0_0] : memref<16x128xf32, #tpu.memory_space<vmem>>, vector<16x128xf32>
    %c0_1 = arith.constant 0 : index
    %c0_2 = arith.constant 0 : index
    %1 = vector.load %arg1[%c0_1, %c0_2] : memref<128x8xf32, #tpu.memory_space<vmem>>, vector<128x8xf32>
    %cst = arith.constant dense<0.000000e+00> : vector<16x8xf32>
    %2 = tpu.matmul %0, %1, %cst {dimension_numbers = #tpu.dot_dimension_numbers<[1], [0], [0], [1], [0, 0, 1, 1], [], []>} : vector<16x128xf32>, vector<128x8xf32>, vector<16x8xf32> -> vector<16x8xf32>
    %c0_3 = arith.constant 0 : index
    %c0_4 = arith.constant 0 : index
    %3 = vector.load %arg2[%c0_3, %c0_4] : memref<1x8xf32, #tpu.memory_space<vmem>>, vector<1x8xf32>
    %4 = vector.broadcast %3 : vector<1x8xf32> to vector<16x8xf32>
    %5 = arith.addf %2, %4 : vector<16x8xf32>
    %cst_5 = arith.constant 0.000000e+00 : f32
    %6 = vector.broadcast %cst_5 : f32 to vector<16x8xf32>
    %7 = arith.maximumf %5, %6 : vector<16x8xf32>
    %c0_6 = arith.constant 0 : index
    %c0_7 = arith.constant 0 : index
    %8 = vector.load %arg3[%c0_6, %c0_7] : memref<8x128xf32, #tpu.memory_space<vmem>>, vector<8x128xf32>
    %cst_8 = arith.constant dense<0.000000e+00> : vector<16x128xf32>
    %9 = tpu.matmul %7, %8, %cst_8 {dimension_numbers = #tpu.dot_dimension_numbers<[1], [0], [0], [1], [0, 0, 1, 1], [], []>} : vector<16x8xf32>, vector<8x128xf32>, vector<16x128xf32> -> vector<16x128xf32>
    %c0_9 = arith.constant 0 : index
    %c0_10 = arith.constant 0 : index
    %10 = vector.load %arg4[%c0_9, %c0_10] : memref<1x128xf32, #tpu.memory_space<vmem>>, vector<1x128xf32>
    %11 = vector.broadcast %10 : vector<1x128xf32> to vector<16x128xf32>
    %12 = arith.addf %9, %11 : vector<16x128xf32>
    %c0_11 = arith.constant 0 : index
    %c0_12 = arith.constant 0 : index
    %13 = vector.load %arg5[%c0_11, %c0_12] : memref<16x128xf32, #tpu.memory_space<vmem>>, vector<16x128xf32>
    tpu.vector_store %arg5[%c0_11, %c0_12], %12 {strides = array<i32>} : memref<16x128xf32, #tpu.memory_space<vmem>>, vector<16x128xf32>,
    return
  }
}

</mosaic_0001>

<llo_original>
// kernel: tpu_custom_call.1
$region0: #{tpu_custom_call.1}
  #allocation0 [shape = 'u32[]', space=smem, size = 0x4, offset = 0x4, fixed_abs, tag = 'smem constant byte address 0x4 - core index']
  #allocation1 [shape = 'u32[144,128]{1,0:T(1,128)}', space=vmem, size = 0x12000, scoped, tag = 'internal scratch']
  %s0 = inlined_call_operand.vmem [shape: f32[16,128], index: 0, kind: input, shape index: {}]
  %s1 = inlined_call_operand.vmem [shape: f32[128,8], index: 1, kind: input, shape index: {}]
  %s2 = inlined_call_operand.vmem [shape: f32[1,8], index: 2, kind: input, shape index: {}]
  %s3 = inlined_call_operand.vmem [shape: f32[8,128], index: 3, kind: input, shape index: {}]
  %s4 = inlined_call_operand.vmem [shape: f32[1,128], index: 4, kind: input, shape index: {}]
  %s5 = inlined_call_operand.hbm [shape: f32[16,128], index: 5, kind: output, shape index: {}]
  %s6 = sld [smem:[#allocation0]]
  $region30: #{tpu_custom_call.1} parent=0
    _
  %s8 = ssub.s32 1, %s6
  %s9 = scalar_select 0, %s8, %s6
  $region1: #{tpu_custom_call.1} parent=0
    #allocation2 [shape = 'u8[8192]{0}', space=vmem, size = 0x2000, scoped, tag = 'output window, operand 0, single buffered']
    #allocation3 [shape = 's32[1]{0}', space=sflag, size = 0x4, scoped, tag = 'scoped memory for tpu_custom_call.1']
    %10 = vsyncpa [#allocation3], 0
    // Predicated region
    $region2: #{tpu_custom_call.1} parent=1 // pred_check
      _
    $region3: #{tpu_custom_call.1} parent=1 // pred_check_branch
      %12 = sbr.rel (0) target = $region5
    $region4: #{tpu_custom_call.1} parent=1 // pred_region
      _
    $region5: #{tpu_custom_call.1} parent=1 // pred_fallthru
      _
    // Predicated region
    $region6: #{tpu_custom_call.1} parent=1 // pred_check
      _
    $region7: #{tpu_custom_call.1} parent=1 // pred_check_branch
      %14 = sbr.rel (0) target = $region9
    $region8: #{tpu_custom_call.1} parent=1 // pred_region
      _
    $region9: #{tpu_custom_call.1} parent=1 // pred_fallthru
      _
    // Predicated region
    $region10: #{tpu_custom_call.1} parent=1 // pred_check
      _
    $region11: #{tpu_custom_call.1} parent=1 // pred_check_branch
      %16 = sbr.rel (0) target = $region13
    $region12: #{tpu_custom_call.1} parent=1 // pred_region
      _
    $region13: #{tpu_custom_call.1} parent=1 // pred_fallthru
      _
    // Predicated region
    $region14: #{tpu_custom_call.1} parent=1 // pred_check
      _
    $region15: #{tpu_custom_call.1} parent=1 // pred_check_branch
      %18 = sbr.rel (0) target = $region17
    $region16: #{tpu_custom_call.1} parent=1 // pred_region
      _
    $region17: #{tpu_custom_call.1} parent=1 // pred_fallthru
      _
    // Predicated region
    $region18: #{tpu_custom_call.1} parent=1 // pred_check
      _
    $region19: #{tpu_custom_call.1} parent=1 // pred_check_branch
      %20 = sbr.rel (0) target = $region21
    $region20: #{tpu_custom_call.1} parent=1 // pred_region
      _
    $region21: #{tpu_custom_call.1} parent=1 // pred_fallthru
      _
    %v21 = vld [vmem:[%s0] sm:$0xff]
    %v22 = vld [vmem:[%s0 + $0x8] sm:$0xff]
    %v23 = vld [vmem:[%s1] sm:$0xff]
    %v24 = vld [vmem:[%s1 + $0x8] sm:$0xff]
    %v25 = vld [vmem:[%s1 + $0x10] sm:$0xff]
    %v26 = vld [vmem:[%s1 + $0x18] sm:$0xff]
    %v27 = vld [vmem:[%s1 + $0x20] sm:$0xff]
    %v28 = vld [vmem:[%s1 + $0x28] sm:$0xff]
    %v29 = vld [vmem:[%s1 + $0x30] sm:$0xff]
    %v30 = vld [vmem:[%s1 + $0x38] sm:$0xff]
    %v31 = vld [vmem:[%s1 + $0x40] sm:$0xff]
    %v32 = vld [vmem:[%s1 + $0x48] sm:$0xff]
    %v33 = vld [vmem:[%s1 + $0x50] sm:$0xff]
    %v34 = vld [vmem:[%s1 + $0x58] sm:$0xff]
    %v35 = vld [vmem:[%s1 + $0x60] sm:$0xff]
    %v36 = vld [vmem:[%s1 + $0x68] sm:$0xff]
    %v37 = vld [vmem:[%s1 + $0x70] sm:$0xff]
    %v38 = vld [vmem:[%s1 + $0x78] sm:$0xff]
    %v39 = vld [vmem:[%s2] sm:$0x1]
    %v41 = vlaneseq
    %v42 = vshrl.u32 %v41, 7
    %v43 = vsub.s32 0, %v42
    %v44 = vrot.slane %v39, %v43
    %46 = vmatprep.subr.mxu0 0.0
    %47 = vmatpush1.msra.mxu0 %v23
    %48 = vmatprep.subr.mxu0 0.0
    %49 = vmatpush1.msra.mxu0 %v24
    %50 = vmatprep.subr.mxu0 0.0
    %51 = vmatpush1.msra.mxu0 %v25
    %52 = vmatprep.subr.mxu0 0.0
    %53 = vmatpush1.msra.mxu0 %v26
    %54 = vmatprep.subr.mxu0 0.0
    %55 = vmatpush1.msra.mxu0 %v27
    %56 = vmatprep.subr.mxu0 0.0
    %57 = vmatpush1.msra.mxu0 %v28
    %58 = vmatprep.subr.mxu0 0.0
    %59 = vmatpush1.msra.mxu0 %v29
    %60 = vmatprep.subr.mxu0 0.0
    %61 = vmatpush1.msra.mxu0 %v30
    %62 = vmatprep.subr.mxu0 0.0
    %63 = vmatpush1.msra.mxu0 %v31
    %64 = vmatprep.subr.mxu0 0.0
    %65 = vmatpush1.msra.mxu0 %v32
    %66 = vmatprep.subr.mxu0 0.0
    %67 = vmatpush1.msra.mxu0 %v33
    %68 = vmatprep.subr.mxu0 0.0
    %69 = vmatpush1.msra.mxu0 %v34
    %70 = vmatprep.subr.mxu0 0.0
    %71 = vmatpush1.msra.mxu0 %v35
    %72 = vmatprep.subr.mxu0 0.0
    %73 = vmatpush1.msra.mxu0 %v36
    %74 = vmatprep.subr.mxu0 0.0
    %75 = vmatpush1.msra.mxu0 %v37
    %76 = vmatprep.subr.mxu0 0.0
    %77 = vmatpush1.msra.mxu0 %v38
    %78 = vmatprep.subr.mxu0 0.0
    %79 = vmatpush1.msra.mxu0 0.0
    %80 = vmatprep.subr.mxu0 0.0
    %81 = vmatpush1.msra.mxu0 0.0
    %82 = vmatprep.subr.mxu0 0.0
    %83 = vmatpush1.msra.mxu0 0.0
    %84 = vmatprep.subr.mxu0 0.0
    %85 = vmatpush1.msra.mxu0 0.0
    %86 = vmatprep.subr.mxu0 0.0
    %87 = vmatpush1.msra.mxu0 0.0
    %88 = vmatprep.subr.mxu0 0.0
    %89 = vmatpush1.msra.mxu0 0.0
    %90 = vmatprep.subr.mxu0 0.0
    %91 = vmatpush1.msra.mxu0 0.0
    %92 = vmatprep.subr.mxu0 0.0
    %93 = vmatpush1.msra.mxu0 0.0
    %94 = vmatprep.subr.mxu0 0.0
    %95 = vmatpush1.msra.mxu0 0.0
    %96 = vmatprep.subr.mxu0 0.0
    %97 = vmatpush1.msra.mxu0 0.0
    %98 = vmatprep.subr.mxu0 0.0
    %99 = vmatpush1.msra.mxu0 0.0
    %100 = vmatprep.subr.mxu0 0.0
    %101 = vmatpush1.msra.mxu0 0.0
    %102 = vmatprep.subr.mxu0 0.0
    %103 = vmatpush1.msra.mxu0 0.0
    %104 = vmatprep.subr.mxu0 0.0
    %105 = vmatpush1.msra.mxu0 0.0
    %106 = vmatprep.subr.mxu0 0.0
    %107 = vmatpush1.msra.mxu0 0.0
    %108 = vmatprep.subr.mxu0 0.0
    %109 = vmatpush1.msra.mxu0 0.0
    %110 = vmatprep.mubr.f32.mxu0 0.0
    %111 = vmatmul.mubr.f32.gmra.mrb[0].mxu0 %v21
    %v112 = vpop.f32.mrb[0].mxu0
    %v113 = vadd.f32 %v44, %v112
    %v114 = vpop.f32.mrb[0].mxu0
    %115 = vmatprep.mubr.f32.mxu0 0.0
    %116 = vmatmul.mubr.f32.gmra.mrb[0].mxu0 %v22
    %v117 = vpop.f32.mrb[0].mxu0
    %v118 = vadd.f32 %v44, %v117
    %v119 = vpop.f32.mrb[0].mxu0
    %120 = vdwg.mxu0
    %v121 = vmax.f32 %v113, 0.0
    %v122 = vmax.f32 %v118, 0.0
    %v123 = vld [vmem:[%s3] sm:$0xff]
    %v124 = vld [vmem:[%s4] sm:$0x1]
    %v126 = vlaneseq
    %v127 = vshrl.u32 %v126, 7
    %v128 = vsub.s32 0, %v127
    %v129 = vrot.slane %v124, %v128
    %vm131 = vcmask 64512
    %v133 = vsel %vm131, %v121, 0
    %v136 = vsel %vm131, %v122, 0
    %138 = vmatprep.subr.mxu0 0.0
    %139 = vmatpush1.msra.mxu0 %v123
    %140 = vmatprep.subr.mxu0 0.0
    %141 = vmatpush1.msra.mxu0 0.0
    %142 = vmatprep.subr.mxu0 0.0
    %143 = vmatpush1.msra.mxu0 0.0
    %144 = vmatprep.subr.mxu0 0.0
    %145 = vmatpush1.msra.mxu0 0.0
    %146 = vmatprep.subr.mxu0 0.0
    %147 = vmatpush1.msra.mxu0 0.0
    %148 = vmatprep.subr.mxu0 0.0
    %149 = vmatpush1.msra.mxu0 0.0
    %150 = vmatprep.subr.mxu0 0.0
    %151 = vmatpush1.msra.mxu0 0.0
    %152 = vmatprep.subr.mxu0 0.0
    %153 = vmatpush1.msra.mxu0 0.0
    %154 = vmatprep.subr.mxu0 0.0
    %155 = vmatpush1.msra.mxu0 0.0
    %156 = vmatprep.subr.mxu0 0.0
    %157 = vmatpush1.msra.mxu0 0.0
    %158 = vmatprep.subr.mxu0 0.0
    %159 = vmatpush1.msra.mxu0 0.0
    %160 = vmatprep.subr.mxu0 0.0
    %161 = vmatpush1.msra.mxu0 0.0
    %162 = vmatprep.subr.mxu0 0.0
    %163 = vmatpush1.msra.mxu0 0.0
    %164 = vmatprep.subr.mxu0 0.0
    %165 = vmatpush1.msra.mxu0 0.0
    %166 = vmatprep.subr.mxu0 0.0
    %167 = vmatpush1.msra.mxu0 0.0
    %168 = vmatprep.subr.mxu0 0.0
    %169 = vmatpush1.msra.mxu0 0.0
    %170 = vmatprep.subr.mxu0 0.0
    %171 = vmatpush1.msra.mxu0 0.0
    %172 = vmatprep.subr.mxu0 0.0
    %173 = vmatpush1.msra.mxu0 0.0
    %174 = vmatprep.subr.mxu0 0.0
    %175 = vmatpush1.msra.mxu0 0.0
    %176 = vmatprep.subr.mxu0 0.0
    %177 = vmatpush1.msra.mxu0 0.0
    %178 = vmatprep.subr.mxu0 0.0
    %179 = vmatpush1.msra.mxu0 0.0
    %180 = vmatprep.subr.mxu0 0.0
    %181 = vmatpush1.msra.mxu0 0.0
    %182 = vmatprep.subr.mxu0 0.0
    %183 = vmatpush1.msra.mxu0 0.0
    %184 = vmatprep.subr.mxu0 0.0
    %185 = vmatpush1.msra.mxu0 0.0
    %186 = vmatprep.subr.mxu0 0.0
    %187 = vmatpush1.msra.mxu0 0.0
    %188 = vmatprep.subr.mxu0 0.0
    %189 = vmatpush1.msra.mxu0 0.0
    %190 = vmatprep.subr.mxu0 0.0
    %191 = vmatpush1.msra.mxu0 0.0
    %192 = vmatprep.subr.mxu0 0.0
    %193 = vmatpush1.msra.mxu0 0.0
    %194 = vmatprep.subr.mxu0 0.0
    %195 = vmatpush1.msra.mxu0 0.0
    %196 = vmatprep.subr.mxu0 0.0
    %197 = vmatpush1.msra.mxu0 0.0
    %198 = vmatprep.subr.mxu0 0.0
    %199 = vmatpush1.msra.mxu0 0.0
    %200 = vmatprep.subr.mxu0 0.0
    %201 = vmatpush1.msra.mxu0 0.0
    %202 = vmatprep.mubr.f32.mxu0 0.0
    %203 = vmatmul.mubr.f32.gmra.mrb[0].mxu0 %v133
    %v204 = vpop.f32.mrb[0].mxu0
    %v205 = vadd.f32 %v129, %v204
    %v206 = vpop.f32.mrb[0].mxu0
    %207 = vmatprep.mubr.f32.mxu0 0.0
    %208 = vmatmul.mubr.f32.gmra.mrb[0].mxu0 %v136
    %v209 = vpop.f32.mrb[0].mxu0
    %v210 = vadd.f32 %v129, %v209
    %v211 = vpop.f32.mrb[0].mxu0
    %212 = vdwg.mxu0
    %213 = vst [vmem:[#allocation2] sm:$0xff] %v205
    %214 = vst [vmem:[#allocation2 + $0x8] sm:$0xff] %v210
    // Predicated region
    $region22: #{tpu_custom_call.1} parent=1 // pred_check
      _
    $region23: #{tpu_custom_call.1} parent=1 // pred_check_branch
      %216 = sbr.rel (0) target = $region25
    $region24: #{tpu_custom_call.1} parent=1 // pred_region
      %s218 = ssub.s32 256, 256
      %219 = vsyncadd [#allocation3], %s218
      %s220 = sshll.u32 [#allocation2], 4
      %s221 = int_to_ptr.vmem [resolvable:$true] %s220
      %226 = dma.vmem_to_hbm [thread:$0]  %s221, 256, %s5, [#allocation3], 128, 128, 8
    $region25: #{tpu_custom_call.1} parent=1 // pred_fallthru
      _
    // Predicated region
    $region26: #{tpu_custom_call.1} parent=1 // pred_check
      _
    $region27: #{tpu_custom_call.1} parent=1 // pred_check_branch
      %228 = sbr.rel (0) target = $region29
    $region28: #{tpu_custom_call.1} parent=1 // pred_region
      %229 = dma.done [#allocation3], 256
    $region29: #{tpu_custom_call.1} parent=1 // pred_fallthru
      _
    %230 = vsyncpa [#allocation3], 1

</llo_original>
